<compile_context>
chip_gen: v5e
topology: v5e:2x2
jax: 0.10.0
libtpu: 0.0.40
codegen_flags: <defaults>
</compile_context>

<pallas_src>
import functools

import jax
import jax.numpy as jnp
from jax.experimental import pallas as pl
from jax.experimental.pallas import tpu as pltpu


def _maxpool_kernel(x_ref, o_ref, t_ref, *, k):
    # x_ref: (TR*k, W)  input rows in natural layout (W on the lane axis)
    # o_ref: (TR,  Wo)  pooled output rows
    # t_ref: (W,   TR)  f32 VMEM scratch holding the transposed vertical fold
    tr, wo = o_ref.shape

    # ---- vertical fold: max over the k rows of each window (unrolled, VPU) ----
    v = x_ref[pl.ds(0, tr, stride=k), :]
    for r in range(1, k):
        v = jnp.maximum(v, x_ref[pl.ds(r, tr, stride=k), :])
    # v: (TR, W)

    # ---- horizontal fold: move W onto the sublane axis so the stride-k window
    # fold uses sublane-strided slices (lane-strided access is not TPU friendly).
    t_ref[...] = jnp.transpose(v.astype(jnp.float32))        # (W, TR)
    h = t_ref[pl.ds(0, wo, stride=k), :]
    for c in range(1, k):
        h = jnp.maximum(h, t_ref[pl.ds(c, wo, stride=k), :])
    # h: (Wo, TR)

    o_ref[...] = jnp.transpose(h).astype(o_ref.dtype)         # (TR, Wo)


def _pick_rows_per_block(r_out, in_bytes_per_out_row, target_bytes):
    """Output rows per grid step: divides r_out, prefers multiples of 8,
    keeps the input block <= target_bytes and the grid >= 2 steps."""
    cap = max(1, int(target_bytes) // int(in_bytes_per_out_row))
    if r_out >= 4:
        cap = min(cap, r_out // 2)          # keep >= 2 grid steps (v7x has 2 TCs)
    cap = max(1, min(cap, r_out))
    divs = [d for d in range(1, cap + 1) if r_out % d == 0]
    mult8 = [d for d in divs if d % 8 == 0]
    return (mult8 or divs)[-1]


def maxpool_pallas(x, ratio, *, target_block_bytes=2 * 1024 * 1024):
    """x: (B, C, H, W) NCHW.  Returns (B, C, H // 2**ratio, W // 2**ratio)."""
    if ratio == 0:          # empty ModuleList -> identity
        return x

    B, C, H, W = x.shape
    k = 2 ** ratio
    Ho, Wo = H // k, W // k
    assert Ho > 0 and Wo > 0, "input too small for the requested pooling ratio"

    Hc = Ho * k
    if Hc != H:
        # Rare (H not divisible by 2**ratio): crop the ignored trailing rows once.
        x = x[:, :, :Hc, :]
    # Free, layout-preserving view: stack all image/channel rows.  Input rows
    # [j*k, j*k + k) map exactly to output row j (the trailing W remainder, if any,
    # is simply never touched by the in-kernel horizontal fold).
    xr = x.reshape(B * C * Hc, W)
    r_out = B * C * Ho

    tr = _pick_rows_per_block(r_out, k * W * x.dtype.itemsize, target_block_bytes)
    grid = (r_out // tr,)

    out = pl.pallas_call(
        functools.partial(_maxpool_kernel, k=k),
        out_shape=jax.ShapeDtypeStruct((r_out, Wo), x.dtype),
        grid_spec=pltpu.PrefetchScalarGridSpec(
            num_scalar_prefetch=0,
            grid=grid,
            in_specs=[pl.BlockSpec((tr * k, W), lambda i: (i, 0))],
            out_specs=pl.BlockSpec((tr, Wo), lambda i: (i, 0)),
            scratch_shapes=[pltpu.VMEM((W, tr), jnp.float32)],
        ),
        compiler_params=pltpu.CompilerParams(
            dimension_semantics=("parallel",),
            vmem_limit_bytes=48 * 1024 * 1024,
        ),
    )(xr)

    return out.reshape(B, C, Ho, Wo)


def maxpool_reference(x, ratio):
    """Pure-JAX reference mimicking the PyTorch module literally
    (`ratio` successive 2x2/stride-2 valid max pools)."""
    for _ in range(ratio):
        x = jax.lax.reduce_window(
            x, -jnp.inf, jax.lax.max,
            window_dimensions=(1, 1, 2, 2),
            window_strides=(1, 1, 2, 2),
            padding="VALID",
        )
    return x


if __name__ == "__main__":
    key = jax.random.PRNGKey(0)
    configs = [
        # (B, C, H,  W,  ratio)
        (2, 4, 32, 32, 2),   # MaxPool(ratio=2): 32x32 -> 8x8
        (2, 4, 16, 16, 1),   # MaxPool(ratio=1): 16x16 -> 8x8
    ]
    for (B, C, H, W, ratio) in configs:
        key, sub = jax.random.split(key)
        x = jax.random.normal(sub, (B, C, H, W), dtype=jnp.float32)

        y = jax.block_until_ready(maxpool_pallas(x, ratio))
        y_ref = maxpool_reference(x, ratio)

        kk = 2 ** ratio
        assert y.shape == (B, C, H // kk, W // kk), y.shape
        assert jnp.allclose(y, y_ref), (
            f"Pallas maxpool mismatch vs reference for {(B, C, H, W, ratio)}")

    print("KERNEL_OK")
</pallas_src>

<mosaic_0001>
module attributes {stable_mosaic.version = 11 : i64} {
  func.func @_maxpool_kernel(%arg0: i32, %arg1: memref<128x32xf32, #tpu.memory_space<vmem>>, %arg2: memref<32x8xf32, #tpu.memory_space<vmem>>, %arg3: memref<32x32xf32, #tpu.memory_space<vmem>>) attributes {dimension_semantics = [#tpu.dimension_semantics<parallel>], iteration_bounds = array<i64: 2>, scalar_prefetch = 0 : i64, scratch_operands = 1 : i64, tpu.core_type = #tpu.core_type<tc>, window_params = [{transform_indices = @transform_0, window_bounds = array<i64: 128, 32>}, {transform_indices = @transform_1, window_bounds = array<i64: 32, 8>}]} {
    %c0 = arith.constant 0 : index
    %c0_0 = arith.constant 0 : index
    %0 = tpu.strided_load %arg1[%c0, %c0_0] {strides = array<i32: 4, 1>} : memref<128x32xf32, #tpu.memory_space<vmem>>, vector<32x32xf32>
    %c1 = arith.constant 1 : index
    %c0_1 = arith.constant 0 : index
    %1 = tpu.strided_load %arg1[%c1, %c0_1] {strides = array<i32: 4, 1>} : memref<128x32xf32, #tpu.memory_space<vmem>>, vector<32x32xf32>
    %2 = arith.maximumf %0, %1 : vector<32x32xf32>
    %c2 = arith.constant 2 : index
    %c0_2 = arith.constant 0 : index
    %3 = tpu.strided_load %arg1[%c2, %c0_2] {strides = array<i32: 4, 1>} : memref<128x32xf32, #tpu.memory_space<vmem>>, vector<32x32xf32>
    %4 = arith.maximumf %2, %3 : vector<32x32xf32>
    %c3 = arith.constant 3 : index
    %c0_3 = arith.constant 0 : index
    %5 = tpu.strided_load %arg1[%c3, %c0_3] {strides = array<i32: 4, 1>} : memref<128x32xf32, #tpu.memory_space<vmem>>, vector<32x32xf32>
    %6 = arith.maximumf %4, %5 : vector<32x32xf32>
    %7 = tpu.transpose %6, [1, 0] : vector<32x32xf32> -> vector<32x32xf32>
    %c0_4 = arith.constant 0 : index
    %c0_5 = arith.constant 0 : index
    %8 = vector.load %arg3[%c0_4, %c0_5] : memref<32x32xf32, #tpu.memory_space<vmem>>, vector<32x32xf32>
    tpu.vector_store %arg3[%c0_4, %c0_5], %7 {strides = array<i32>} : memref<32x32xf32, #tpu.memory_space<vmem>>, vector<32x32xf32>,
    %c0_6 = arith.constant 0 : index
    %c0_7 = arith.constant 0 : index
    %9 = tpu.strided_load %arg3[%c0_6, %c0_7] {strides = array<i32: 4, 1>} : memref<32x32xf32, #tpu.memory_space<vmem>>, vector<8x32xf32>
    %c1_8 = arith.constant 1 : index
    %c0_9 = arith.constant 0 : index
    %10 = tpu.strided_load %arg3[%c1_8, %c0_9] {strides = array<i32: 4, 1>} : memref<32x32xf32, #tpu.memory_space<vmem>>, vector<8x32xf32>
    %11 = arith.maximumf %9, %10 : vector<8x32xf32>
    %c2_10 = arith.constant 2 : index
    %c0_11 = arith.constant 0 : index
    %12 = tpu.strided_load %arg3[%c2_10, %c0_11] {strides = array<i32: 4, 1>} : memref<32x32xf32, #tpu.memory_space<vmem>>, vector<8x32xf32>
    %13 = arith.maximumf %11, %12 : vector<8x32xf32>
    %c3_12 = arith.constant 3 : index
    %c0_13 = arith.constant 0 : index
    %14 = tpu.strided_load %arg3[%c3_12, %c0_13] {strides = array<i32: 4, 1>} : memref<32x32xf32, #tpu.memory_space<vmem>>, vector<8x32xf32>
    %15 = arith.maximumf %13, %14 : vector<8x32xf32>
    %16 = tpu.transpose %15, [1, 0] : vector<8x32xf32> -> vector<32x8xf32>
    %c0_14 = arith.constant 0 : index
    %c0_15 = arith.constant 0 : index
    %17 = vector.load %arg2[%c0_14, %c0_15] : memref<32x8xf32, #tpu.memory_space<vmem>>, vector<32x8xf32>
    tpu.vector_store %arg2[%c0_14, %c0_15], %16 {strides = array<i32>} : memref<32x8xf32, #tpu.memory_space<vmem>>, vector<32x8xf32>,
    return
  }
  func.func @transform_0(%arg0: i32) -> (i32, i32) {
    %c0_i32 = arith.constant 0 : i32
    %c0_i32_0 = arith.constant 0 : i32
    return %arg0, %c0_i32 : i32, i32
  }
  func.func @transform_1(%arg0: i32) -> (i32, i32) {
    %c0_i32 = arith.constant 0 : i32
    %c0_i32_0 = arith.constant 0 : i32
    return %arg0, %c0_i32 : i32, i32
  }
}

</mosaic_0001>

<llo_original>
// kernel: tpu_custom_call.1
$region0: #{tpu_custom_call.1}
  #allocation0 [shape = 'u32[]', space=smem, size = 0x4, offset = 0x4, fixed_abs, tag = 'smem constant byte address 0x4 - core index']
  #allocation1 [shape = 'u32[72,128]{1,0:T(1,128)}', space=vmem, size = 0x9000, scoped, tag = 'internal scratch']
  #allocation2 [shape = 'f32[32,32]{1,0:T(8,128)}', space=vmem, size = 0x4000, scoped, tag = 'scratch operand']
  %s0 = inlined_call_operand.vmem [shape: f32[256,32], index: 0, kind: input, shape index: {}]
  %s1 = inlined_call_operand.vmem [shape: f32[64,8], index: 1, kind: output, shape index: {}]
  %s2 = sld [smem:[#allocation0]]
  $region37: #{tpu_custom_call.1} parent=0
    _
  %s4 = ssub.s32 1, %s2
  %s5 = scalar_select 0, %s4, %s2
  loop: start=0, step=1, limit=4
  $region2: #{tpu_custom_call.1} parent=0 // loop_pre_header
    _
  $region3: #{tpu_custom_call.1} parent=0 // loop_header
    %s7 = sphi 0, %s11
    %p8 = scmp.ge.s32.totalorder %s7, 4
    %s17 = sphi 0, %s19
    %s20 = sphi 0, %s17
    %s21 = sphi 0, %s20
    %s37 = sphi 0, %s21
    %s43 = sphi 0, %s45
    %s46 = sphi 0, %s43
    %s47 = sphi 0, %s46
    %s63 = sphi 0, %s47
  $region4: #{tpu_custom_call.1} parent=0 // loop_header_branch
    %10 = sbr.rel (%p8) target = $region8
  $region5: #{tpu_custom_call.1} parent=0 // loop_body
    %s12 = ssub.s32 %s7, 1
    %s13 = ssub.s32 %s7, 2
    %s14 = sadd.s32 %s7, 1
    %s15 = ssub.s32 %s7, %s14
    %p16 = scmp.eq.s32.totalorder %s15, 0
    %s18 = sadd.s32 %s17, 1
    %s19 = scalar_select %p16, %s17, %s18
    %p22 = pneg %p16
    %p23 = scmp.eq.s32.totalorder %s7, 1
    %p24 = por %p22, %p23
    %p25 = scmp.ne.s32.totalorder %s17, %s20
    %p26 = scmp.eq.s32.totalorder %s7, 0
    %p27 = por %p25, %p26
    %p28 = scmp.ne.s32.totalorder %s17, %s20
    %p29 = scmp.eq.s32.totalorder %s12, 1
    %p30 = por %p28, %p29
    %p31 = scmp.ne.s32.totalorder %s20, %s21
    %p32 = scmp.eq.s32.totalorder %s12, 0
    %p33 = por %p31, %p32
    %p34 = scmp.ne.s32.totalorder %s20, %s21
    %p35 = scmp.eq.s32.totalorder %s13, 1
    %p36 = por %p34, %p35
    %p38 = scmp.ne.s32.totalorder %s21, %s37
    %p39 = scmp.eq.s32.totalorder %s13, 0
    %p40 = por %p38, %p39
    %s41 = ssub.s32 %s7, %s14
    %p42 = scmp.eq.s32.totalorder %s41, 0
    %s44 = sadd.s32 %s43, 1
    %s45 = scalar_select %p42, %s43, %s44
    %p48 = pneg %p42
    %p49 = scmp.eq.s32.totalorder %s7, 1
    %p50 = por %p48, %p49
    %p51 = scmp.ne.s32.totalorder %s43, %s46
    %p52 = scmp.eq.s32.totalorder %s7, 0
    %p53 = por %p51, %p52
    %p54 = scmp.ne.s32.totalorder %s43, %s46
    %p55 = scmp.eq.s32.totalorder %s12, 1
    %p56 = por %p54, %p55
    %p57 = scmp.ne.s32.totalorder %s46, %s47
    %p58 = scmp.eq.s32.totalorder %s12, 0
    %p59 = por %p57, %p58
    %p60 = scmp.ne.s32.totalorder %s46, %s47
    %p61 = scmp.eq.s32.totalorder %s13, 1
    %p62 = por %p60, %p61
    %p64 = scmp.ne.s32.totalorder %s47, %s63
    %p65 = scmp.eq.s32.totalorder %s13, 0
    %p66 = por %p64, %p65
    %p67 = scmp.le.s32.totalorder 1, %s7
    %p68 = scmp.lt.s32.totalorder %s7, 3
    %p69 = pnand %p67, %p68
    %p70 = pneg %p69
    // Predicated region
    $region9: #{tpu_custom_call.1} parent=5 // pred_check
      _
    $region10: #{tpu_custom_call.1} parent=5 // pred_check_branch
      %72 = sbr.rel (%p69) target = $region12
    $region11: #{tpu_custom_call.1} parent=5 // pred_region
      %s73 = ssub.s32 %s7, 1
    $region12: #{tpu_custom_call.1} parent=5 // pred_fallthru
      _
    %p74 = scmp.lt.s32.totalorder %s7, 2
    // Predicated region
    $region13: #{tpu_custom_call.1} parent=5 // pred_check
      %p75 = pneg %p74
    $region14: #{tpu_custom_call.1} parent=5 // pred_check_branch
      %77 = sbr.rel (%p75) target = $region16
    $region15: #{tpu_custom_call.1} parent=5 // pred_region
      // Predicated region
      $region17: #{tpu_custom_call.1} parent=15 // pred_check
        %p78 = pneg %p27
      $region18: #{tpu_custom_call.1} parent=15 // pred_check_branch
        %80 = sbr.rel (%p78) target = $region20
      $region19: #{tpu_custom_call.1} parent=15 // pred_region
        %s81 = smul.u32 16, %s7
        %p82 = scmp.lt.s32.totalorder %s81, 31
        %s83 = scalar_select %p82, %s81, 31
        %s84 = smul.addr %s83, 8
        %s85 = scalar_lea.vmem %s0, %s84
        %s86 = smul.u32 16, %s7
      $region20: #{tpu_custom_call.1} parent=15 // pred_fallthru
        _
    $region16: #{tpu_custom_call.1} parent=5 // pred_fallthru
      _
    %p87 = scmp.le.s32.totalorder 1, %s7
    %p88 = scmp.lt.s32.totalorder %s7, 3
    %p89 = pnand %p87, %p88
    %p90 = pneg %p89
    // Predicated region
    $region21: #{tpu_custom_call.1} parent=5 // pred_check
      _
    $region22: #{tpu_custom_call.1} parent=5 // pred_check_branch
      %92 = sbr.rel (%p89) target = $region24
    $region23: #{tpu_custom_call.1} parent=5 // pred_region
      %s93 = ssub.s32 %s7, 1
      %s94 = smul.u32 16, %s12
      %p95 = scmp.lt.s32.totalorder %s94, 31
      %s96 = scalar_select %p95, %s94, 31
      %s97 = smul.addr %s96, 8
      %s98 = scalar_lea.vmem %s0, %s97
      %p99 = pneg %p33
      %p100 = pneg %p30
      %p101 = pneg %p59
      %p102 = pneg %p56
      %s103 = smul.u32 4, %s12
      %p104 = scmp.lt.s32.totalorder %s103, 7
      %s105 = scalar_select %p104, %s103, 7
      %s106 = smul.addr %s105, 8
      %s107 = scalar_lea.vmem %s1, %s106
      %s108 = smul.u32 16, %s12
      %p109 = scmp.lt.s32.totalorder %s108, 31
      %s110 = scalar_select %p109, %s108, 31
      %s111 = smul.addr %s110, 8
      %s112 = scalar_lea.vmem %s0, %s111
      %s113 = smul.u32 16, %s12
      %s114 = smul.u32 4, %s12
      %p115 = scmp.lt.s32.totalorder %s114, 7
      %s116 = scalar_select %p115, %s114, 7
      %s117 = smul.addr %s116, 8
      %s118 = scalar_lea.vmem %s1, %s117
      %s119 = smul.u32 4, %s12
      %v120 = vld [vmem:[%s112] ss:$4 sm:$0xff]
      %s121 = scalar_lea.vmem %s112, 32
      %v122 = vld [vmem:[%s121] ss:$4 sm:$0xff]
      %s123 = scalar_lea.vmem %s112, 64
      %v124 = vld [vmem:[%s123] ss:$4 sm:$0xff]
      %s125 = scalar_lea.vmem %s112, 96
      %v126 = vld [vmem:[%s125] ss:$4 sm:$0xff]
      %s127 = scalar_lea.vmem %s112, 1
      %v128 = vld [vmem:[%s127] ss:$4 sm:$0xff]
      %s129 = scalar_lea.vmem %s112, 33
      %v130 = vld [vmem:[%s129] ss:$4 sm:$0xff]
      %s131 = scalar_lea.vmem %s112, 65
      %v132 = vld [vmem:[%s131] ss:$4 sm:$0xff]
      %s133 = scalar_lea.vmem %s112, 97
      %v134 = vld [vmem:[%s133] ss:$4 sm:$0xff]
      %v135 = vmax.f32 %v120, %v128
      %v136 = vmax.f32 %v122, %v130
      %v137 = vmax.f32 %v124, %v132
      %v138 = vmax.f32 %v126, %v134
      %s139 = scalar_lea.vmem %s112, 2
      %v140 = vld [vmem:[%s139] ss:$4 sm:$0xff]
      %s141 = scalar_lea.vmem %s112, 34
      %v142 = vld [vmem:[%s141] ss:$4 sm:$0xff]
      %s143 = scalar_lea.vmem %s112, 66
      %v144 = vld [vmem:[%s143] ss:$4 sm:$0xff]
      %s145 = scalar_lea.vmem %s112, 98
      %v146 = vld [vmem:[%s145] ss:$4 sm:$0xff]
      %v147 = vmax.f32 %v135, %v140
      %v148 = vmax.f32 %v136, %v142
      %v149 = vmax.f32 %v137, %v144
      %v150 = vmax.f32 %v138, %v146
      %s151 = scalar_lea.vmem %s112, 3
      %v152 = vld [vmem:[%s151] ss:$4 sm:$0xff]
      %s153 = scalar_lea.vmem %s112, 35
      %v154 = vld [vmem:[%s153] ss:$4 sm:$0xff]
      %s155 = scalar_lea.vmem %s112, 67
      %v156 = vld [vmem:[%s155] ss:$4 sm:$0xff]
      %s157 = scalar_lea.vmem %s112, 99
      %v158 = vld [vmem:[%s157] ss:$4 sm:$0xff]
      %v159 = vmax.f32 %v147, %v152
      %v160 = vmax.f32 %v148, %v154
      %v161 = vmax.f32 %v149, %v156
      %v162 = vmax.f32 %v150, %v158
      %163 = vxpose.xlu0.b32.start [1/16] %v159, 128
      %164 = vxpose.xlu0.b32.cont [2/16] %v160, 128
      %165 = vxpose.xlu0.b32.cont [3/16] %v161, 128
      %166 = vxpose.xlu0.b32.cont [4/16] %v162, 128
      %167 = vxpose.xlu0.b32.cont [5/16] 0.0, 128
      %168 = vxpose.xlu0.b32.cont [6/16] 0.0, 128
      %169 = vxpose.xlu0.b32.cont [7/16] 0.0, 128
      %170 = vxpose.xlu0.b32.cont [8/16] 0.0, 128
      %171 = vxpose.xlu0.b32.cont [9/16] 0.0, 128
      %172 = vxpose.xlu0.b32.cont [10/16] 0.0, 128
      %173 = vxpose.xlu0.b32.cont [11/16] 0.0, 128
      %174 = vxpose.xlu0.b32.cont [12/16] 0.0, 128
      %175 = vxpose.xlu0.b32.cont [13/16] 0.0, 128
      %176 = vxpose.xlu0.b32.cont [14/16] 0.0, 128
      %177 = vxpose.xlu0.b32.cont [15/16] 0.0, 128
      %178 = vxpose.xlu0.b32.end [16/16] 0.0, 128
      %v179 = vpop.trf.xlu0
      %v180 = vpop.trf.xlu0
      %v181 = vpop.trf.xlu0
      %v182 = vpop.trf.xlu0
      %v183 = vpop.trf.xlu0
      %v184 = vpop.trf.xlu0
      %v185 = vpop.trf.xlu0
      %v186 = vpop.trf.xlu0
      %v187 = vpop.trf.xlu0
      %v188 = vpop.trf.xlu0
      %v189 = vpop.trf.xlu0
      %v190 = vpop.trf.xlu0
      %v191 = vpop.trf.xlu0
      %v192 = vpop.trf.xlu0
      %v193 = vpop.trf.xlu0
      %v194 = vpop.trf.xlu0
      %vm195 = vcmask 261120
      %196 = vst.msk [vmem:[#allocation2] sm:$0xff] %vm195, %v179
      %197 = vst.msk [vmem:[#allocation2 + $0x8] sm:$0xff] %vm195, %v180
      %198 = vst.msk [vmem:[#allocation2 + $0x10] sm:$0xff] %vm195, %v181
      %199 = vst.msk [vmem:[#allocation2 + $0x18] sm:$0xff] %vm195, %v182
      %v200 = vld [vmem:[#allocation2] ss:$4 sm:$0xff]
      %s201 = scalar_lea.vmem [#allocation2], 1
      %v202 = vld [vmem:[%s201] ss:$4 sm:$0xff]
      %v203 = vmax.f32 %v200, %v202
      %s204 = scalar_lea.vmem [#allocation2], 2
      %v205 = vld [vmem:[%s204] ss:$4 sm:$0xff]
      %v206 = vmax.f32 %v203, %v205
      %s207 = scalar_lea.vmem [#allocation2], 3
      %v208 = vld [vmem:[%s207] ss:$4 sm:$0xff]
      %v209 = vmax.f32 %v206, %v208
      %210 = vxpose.xlu0.b32.start [1/16] %v209, 128
      %211 = vxpose.xlu0.b32.cont [2/16] 0.0, 128
      %212 = vxpose.xlu0.b32.cont [3/16] 0.0, 128
      %213 = vxpose.xlu0.b32.cont [4/16] 0.0, 128
      %214 = vxpose.xlu0.b32.cont [5/16] 0.0, 128
      %215 = vxpose.xlu0.b32.cont [6/16] 0.0, 128
      %216 = vxpose.xlu0.b32.cont [7/16] 0.0, 128
      %217 = vxpose.xlu0.b32.cont [8/16] 0.0, 128
      %218 = vxpose.xlu0.b32.cont [9/16] 0.0, 128
      %219 = vxpose.xlu0.b32.cont [10/16] 0.0, 128
      %220 = vxpose.xlu0.b32.cont [11/16] 0.0, 128
      %221 = vxpose.xlu0.b32.cont [12/16] 0.0, 128
      %222 = vxpose.xlu0.b32.cont [13/16] 0.0, 128
      %223 = vxpose.xlu0.b32.cont [14/16] 0.0, 128
      %224 = vxpose.xlu0.b32.cont [15/16] 0.0, 128
      %225 = vxpose.xlu0.b32.end [16/16] 0.0, 128
      %v226 = vpop.trf.xlu0
      %v227 = vpop.trf.xlu0
      %v228 = vpop.trf.xlu0
      %v229 = vpop.trf.xlu0
      %v230 = vpop.trf.xlu0
      %v231 = vpop.trf.xlu0
      %v232 = vpop.trf.xlu0
      %v233 = vpop.trf.xlu0
      %v234 = vpop.trf.xlu0
      %v235 = vpop.trf.xlu0
      %v236 = vpop.trf.xlu0
      %v237 = vpop.trf.xlu0
      %v238 = vpop.trf.xlu0
      %v239 = vpop.trf.xlu0
      %v240 = vpop.trf.xlu0
      %v241 = vpop.trf.xlu0
      %vm242 = vcmask 64512
      %243 = vst.msk [vmem:[%s118] sm:$0xff] %vm242, %v226
      %244 = vst.msk [vmem:[%s118 + $0x8] sm:$0xff] %vm242, %v227
      %245 = vst.msk [vmem:[%s118 + $0x10] sm:$0xff] %vm242, %v228
      %246 = vst.msk [vmem:[%s118 + $0x18] sm:$0xff] %vm242, %v229
      %s247 = smul.u32 4, %s12
      %p248 = scmp.lt.s32.totalorder %s247, 7
      %s249 = scalar_select %p248, %s247, 7
      %s250 = smul.addr %s249, 8
      %s251 = scalar_lea.vmem %s1, %s250
      // Predicated region
      $region25: #{tpu_custom_call.1} parent=23 // pred_check
        %p252 = pneg %p56
      $region26: #{tpu_custom_call.1} parent=23 // pred_check_branch
        %254 = sbr.rel (%p252) target = $region28
      $region27: #{tpu_custom_call.1} parent=23 // pred_region
        %s255 = smul.u32 4, %s12
      $region28: #{tpu_custom_call.1} parent=23 // pred_fallthru
        _
    $region24: #{tpu_custom_call.1} parent=5 // pred_fallthru
      _
    %p256 = scmp.le.s32.totalorder 2, %s7
    // Predicated region
    $region29: #{tpu_custom_call.1} parent=5 // pred_check
      %p257 = pneg %p256
    $region30: #{tpu_custom_call.1} parent=5 // pred_check_branch
      %259 = sbr.rel (%p257) target = $region32
    $region31: #{tpu_custom_call.1} parent=5 // pred_region
      %s260 = ssub.s32 %s7, 2
      // Predicated region
      $region33: #{tpu_custom_call.1} parent=31 // pred_check
        %p261 = pneg %p62
      $region34: #{tpu_custom_call.1} parent=31 // pred_check_branch
        %263 = sbr.rel (%p261) target = $region36
      $region35: #{tpu_custom_call.1} parent=31 // pred_region
        %s264 = smul.u32 4, %s13
        %p265 = scmp.lt.s32.totalorder %s264, 7
        %s266 = scalar_select %p265, %s264, 7
        %s267 = smul.addr %s266, 8
        %s268 = scalar_lea.vmem %s1, %s267
      $region36: #{tpu_custom_call.1} parent=31 // pred_fallthru
        _
    $region32: #{tpu_custom_call.1} parent=5 // pred_fallthru
      _
  $region6: #{tpu_custom_call.1} parent=0 // loop_footer
    %s11 = sadd.s32 1, %s7
  $region7: #{tpu_custom_call.1} parent=0 // loop_footer_branch
    %6 = sbr.rel target = $region3
  $region8: #{tpu_custom_call.1} parent=0 // loop_exit
    _

</llo_original>
